<compile_context>
chip_gen: v6e
topology: v6e:2x2x1
jax: 0.10.0
libtpu: 0.0.40
codegen_flags: <defaults>
</compile_context>

<pallas_src>
import functools
import math

import jax
import jax.numpy as jnp
from jax.experimental import pallas as pl
from jax.experimental.pallas import tpu as pltpu


def _round_up(x, m):
    return ((x + m - 1) // m) * m


def sage_mean_kernel(xaug_ref, adj_ref, hself_ref, out_ref, acc_ref, *, d):
    """One (dst tile i, src chunk k) grid step of out^T = X_aug^T @ A^T.

    xaug_ref : (DA, TK)  bf16  source features^T; row d is all-ones (degree), rows
                               d+1..DA-1 are zero padding
    adj_ref  : (TK, TN)  bf16  adjacency^T block  A^T[src_chunk, dst_tile]
    hself_ref: (D,  TN)  f32   self (dst) features^T for this dst tile (resident over k)
    out_ref  : (D,  TN)  f32   output tile (written only in the finalize step)
    acc_ref  : (DA, TN)  f32   accumulator: rows [:d] = neighbor sum, row d = in-degree
    """
    k = pl.program_id(1)

    @pl.when(k == 0)
    def _init():
        acc_ref[...] = jnp.zeros_like(acc_ref)

    # Native bf16 MXU path, f32 accumulation; both the neighbor-feature sum and the
    # in-degree (via the ones row) come out of the same matmul.
    acc_ref[...] += jnp.dot(xaug_ref[...], adj_ref[...],
                            preferred_element_type=jnp.float32)

    @pl.when(k == pl.num_programs(1) - 1)
    def _finalize():
        acc = acc_ref[...]
        neigh_sum = acc[:d, :]          # (D, TN)
        deg = acc[d:d + 1, :]           # (1, TN)
        # fn.mean('m','neigh'): zero-in-degree nodes get 0 (neigh_sum is 0 there).
        # Exact divide; once per dst tile, off the critical path.
        inv = 1.0 / jnp.maximum(deg, 1.0)
        # rst = h_self + h_neigh (no fc_self/fc_neigh/activation/norm on this path).
        out_ref[...] = (hself_ref[...] + neigh_sum * inv).astype(out_ref.dtype)


def make_sage_conv_mean(adj, *, tile_n=512, tile_k=2048,
                        vmem_limit_bytes=32 * 1024 * 1024):
    """One-time setup for a fixed graph; returns forward(feat) -> (N, D) float32.

    adj: (N_dst, N_src) dense adjacency (A[i, j] = 1 iff edge j -> i), any real dtype.
    The O(N^2) transpose / bf16 cast / pad happens once here, not per forward call.
    """
    n_dst, n_src = adj.shape
    assert n_dst == n_src, "homogeneous graph expected"

    # dst tile on lanes (multiple of 128), src/K tile multiple of 128; clamp to size.
    tile_n = max(128, min(_round_up(tile_n, 128), _round_up(n_dst, 128)))
    tile_k = max(128, min(_round_up(tile_k, 128), _round_up(n_src, 128)))
    n_dst_p = _round_up(n_dst, tile_n)
    n_src_p = _round_up(n_src, tile_k)

    # One-time adjacency prep: [src, dst] layout (dst on lanes), bf16 (exact for 0/1,
    # halves the dominant O(N^2) HBM stream), zero-pad to tile multiples.
    adj_t = jnp.asarray(adj).astype(jnp.bfloat16).T
    adj_t = jnp.pad(adj_t, ((0, n_src_p - n_src), (0, n_dst_p - n_dst)))
    adj_t = jax.block_until_ready(adj_t)

    grid = (n_dst_p // tile_n, n_src_p // tile_k)

    def forward(feat):
        n, d = feat.shape
        assert n == n_src, "feature count must match graph node count"
        d_aug = _round_up(d + 1, 16)  # bf16 sublane packing; row d carries the ones

        feat32 = feat.astype(jnp.float32)
        feat_t_bf16 = feat32.T.astype(jnp.bfloat16)                   # (D, N)
        ones_row = jnp.ones((1, n), jnp.bfloat16)
        xaug_t = jnp.concatenate([feat_t_bf16, ones_row], axis=0)     # (D+1, N)
        xaug_t = jnp.pad(xaug_t, ((0, d_aug - (d + 1)), (0, n_src_p - n)))
        hself_t = jnp.pad(feat32.T, ((0, 0), (0, n_dst_p - n)))       # f32, exact add

        cost = pl.CostEstimate(
            flops=2 * n_dst_p * n_src_p * d_aug,
            transcendentals=0,
            bytes_accessed=(adj_t.size * 2                 # adjacency read once (bf16)
                            + grid[0] * xaug_t.size * 2    # features re-read per dst tile
                            + hself_t.size * 4
                            + d * n_dst_p * 4),
        )

        out_t = pl.pallas_call(
            functools.partial(sage_mean_kernel, d=d),
            out_shape=jax.ShapeDtypeStruct((d, n_dst_p), jnp.float32),
            grid_spec=pltpu.PrefetchScalarGridSpec(
                num_scalar_prefetch=0,
                grid=grid,
                in_specs=[
                    pl.BlockSpec((d_aug, tile_k), lambda i, k: (0, k)),   # X_aug^T chunk
                    pl.BlockSpec((tile_k, tile_n), lambda i, k: (k, i)),  # A^T block
                    pl.BlockSpec((d, tile_n), lambda i, k: (0, i)),       # self feats^T
                ],
                out_specs=pl.BlockSpec((d, tile_n), lambda i, k: (0, i)),
                scratch_shapes=[pltpu.VMEM((d_aug, tile_n), jnp.float32)],
            ),
            compiler_params=pltpu.CompilerParams(
                dimension_semantics=("parallel", "arbitrary"),
                vmem_limit_bytes=vmem_limit_bytes,
            ),
            cost_estimate=cost,
        )(xaug_t, adj_t, hself_t)

        # Back to the module's natural (N, D) layout (O(N*D), cheap vs the N^2 kernel).
        return out_t[:, :n_dst].T

    return forward


def glorot_uniform(key, shape, gain):
    """nn.init.xavier_uniform_ for a Linear weight of shape (out, in)."""
    fan_out, fan_in = shape
    a = gain * math.sqrt(6.0 / (fan_in + fan_out))
    return jax.random.uniform(key, shape, jnp.float32, -a, a)


def reference_forward(adj, feat):
    """Plain-JAX mirror of the PyTorch forward under this configuration."""
    adj = adj.astype(jnp.float32)
    deg = jnp.sum(adj, axis=1, keepdims=True)
    h_neigh = (adj @ feat) / jnp.maximum(deg, 1.0)
    return feat + h_neigh


if __name__ == "__main__":
    N = 512           # number of nodes (small but large enough to exercise tiling)
    IN_FEATS = 32     # in_feats == out_feats -> lin_before_mp is False
    OUT_FEATS = 32

    key = jax.random.PRNGKey(0)
    k_feat, k_adj, k_wn, k_ws, _ = jax.random.split(key, 5)

    # Deterministic parameter init mirroring __init__ / reset_parameters shapes.
    # (Not applied on this forward path of the reference module; kept for fidelity.)
    gain = math.sqrt(2.0)  # calculate_gain('relu')
    fc_neigh_w = glorot_uniform(k_wn, (OUT_FEATS, IN_FEATS), gain)   # fc_neigh.weight
    fc_self_w = glorot_uniform(k_ws, (OUT_FEATS, IN_FEATS), gain)    # fc_self.weight
    fc_self_b = jnp.zeros((OUT_FEATS,), jnp.float32)                 # fc_self.bias
    del fc_neigh_w, fc_self_w, fc_self_b

    # Inputs: node features and a random directed graph (dense adjacency A[dst, src]).
    feat = jax.random.normal(k_feat, (N, IN_FEATS), jnp.float32)
    adj = (jax.random.uniform(k_adj, (N, N)) < 0.1).astype(jnp.float32)

    # tile_n=256, tile_k=256 here so both the parallel dst axis (grid[0]=2) and the
    # K-accumulation path (init / accumulate / finalize) are exercised with a 2x2 grid.
    # For large graphs the defaults (tile_n=512, tile_k=2048) give ~2 MB adjacency DMA
    # per step and stay well under the 32 MiB VMEM budget.
    sage_forward = make_sage_conv_mean(adj, tile_n=256, tile_k=256)
    out = sage_forward(feat)
    out = jax.block_until_ready(out)

    ref = reference_forward(adj, feat)
    assert out.shape == (N, OUT_FEATS)
    # bf16 source features on the MXU path (f32 accumulation, exact f32 self-add,
    # exact divide) keep the error ~1e-3; adjacency/degree are exact for 0/1.
    assert jnp.allclose(out, ref, atol=1e-2, rtol=1e-2), "mismatch vs JAX reference"

    print("KERNEL_OK")
</pallas_src>

<mosaic_0001>
module attributes {stable_mosaic.version = 11 : i64} {
  func.func @sage_mean_kernel(%arg0: i32, %arg1: i32, %arg2: memref<48x256xbf16, #tpu.memory_space<vmem>>, %arg3: memref<256x256xbf16, #tpu.memory_space<vmem>>, %arg4: memref<32x256xf32, #tpu.memory_space<vmem>>, %arg5: memref<32x256xf32, #tpu.memory_space<vmem>>, %arg6: memref<48x256xf32, #tpu.memory_space<vmem>>) attributes {dimension_semantics = [#tpu.dimension_semantics<parallel>, #tpu.dimension_semantics<arbitrary>], iteration_bounds = array<i64: 2, 2>, scalar_prefetch = 0 : i64, scratch_operands = 1 : i64, tpu.core_type = #tpu.core_type<tc>, window_params = [{transform_indices = @transform_0, window_bounds = array<i64: 48, 256>}, {transform_indices = @transform_1, window_bounds = array<i64: 256, 256>}, {transform_indices = @transform_2, window_bounds = array<i64: 32, 256>}, {transform_indices = @transform_3, window_bounds = array<i64: 32, 256>}]} {
    %c0_i32 = arith.constant 0 : i32
    %0 = arith.cmpi eq, %arg1, %c0_i32 : i32
    %1 = arith.extui %0 : i1 to i32
    %c0_i32_0 = arith.constant 0 : i32
    %2 = arith.cmpi ne, %1, %c0_i32_0 : i32
    scf.if %2 {
      %cst_9 = arith.constant 0.000000e+00 : f32
      %12 = vector.broadcast %cst_9 : f32 to vector<48x256xf32>
      %c0_10 = arith.constant 0 : index
      %c0_11 = arith.constant 0 : index
      %13 = vector.load %arg6[%c0_10, %c0_11] : memref<48x256xf32, #tpu.memory_space<vmem>>, vector<48x256xf32>
      tpu.vector_store %arg6[%c0_10, %c0_11], %12 {strides = array<i32>} : memref<48x256xf32, #tpu.memory_space<vmem>>, vector<48x256xf32>,
    } else {
    }
    %c0 = arith.constant 0 : index
    %c0_1 = arith.constant 0 : index
    %3 = vector.load %arg6[%c0, %c0_1] : memref<48x256xf32, #tpu.memory_space<vmem>>, vector<48x256xf32>
    %c0_2 = arith.constant 0 : index
    %c0_3 = arith.constant 0 : index
    %4 = vector.load %arg2[%c0_2, %c0_3] : memref<48x256xbf16, #tpu.memory_space<vmem>>, vector<48x256xbf16>
    %c0_4 = arith.constant 0 : index
    %c0_5 = arith.constant 0 : index
    %5 = vector.load %arg3[%c0_4, %c0_5] : memref<256x256xbf16, #tpu.memory_space<vmem>>, vector<256x256xbf16>
    %cst = arith.constant dense<0.000000e+00> : vector<48x256xf32>
    %6 = tpu.matmul %4, %5, %cst {dimension_numbers = #tpu.dot_dimension_numbers<[1], [0], [0], [1], [0, 0, 1, 1], [], []>} : vector<48x256xbf16>, vector<256x256xbf16>, vector<48x256xf32> -> vector<48x256xf32>
    %7 = arith.addf %3, %6 : vector<48x256xf32>
    %c0_6 = arith.constant 0 : index
    %c0_7 = arith.constant 0 : index
    %8 = vector.load %arg6[%c0_6, %c0_7] : memref<48x256xf32, #tpu.memory_space<vmem>>, vector<48x256xf32>
    tpu.vector_store %arg6[%c0_6, %c0_7], %7 {strides = array<i32>} : memref<48x256xf32, #tpu.memory_space<vmem>>, vector<48x256xf32>,
    %c1_i32 = arith.constant 1 : i32
    %9 = arith.cmpi eq, %arg1, %c1_i32 : i32
    %10 = arith.extui %9 : i1 to i32
    %c0_i32_8 = arith.constant 0 : i32
    %11 = arith.cmpi ne, %10, %c0_i32_8 : i32
    scf.if %11 {
      %c0_9 = arith.constant 0 : index
      %c0_10 = arith.constant 0 : index
      %12 = vector.load %arg6[%c0_9, %c0_10] : memref<48x256xf32, #tpu.memory_space<vmem>>, vector<48x256xf32>
      %13 = vector.extract_strided_slice %12 {offsets = [0, 0], sizes = [32, 256], strides = [1, 1]} : vector<48x256xf32> to vector<32x256xf32>
      %14 = vector.extract_strided_slice %12 {offsets = [32, 0], sizes = [1, 256], strides = [1, 1]} : vector<48x256xf32> to vector<1x256xf32>
      %cst_11 = arith.constant 1.000000e+00 : f32
      %15 = vector.broadcast %cst_11 : f32 to vector<1x256xf32>
      %16 = arith.maximumf %14, %15 : vector<1x256xf32>
      %cst_12 = arith.constant 1.000000e+00 : f32
      %17 = vector.broadcast %cst_12 : f32 to vector<1x256xf32>
      %18 = arith.divf %17, %16 : vector<1x256xf32>
      %c0_13 = arith.constant 0 : index
      %c0_14 = arith.constant 0 : index
      %19 = vector.load %arg4[%c0_13, %c0_14] : memref<32x256xf32, #tpu.memory_space<vmem>>, vector<32x256xf32>
      %20 = vector.broadcast %18 : vector<1x256xf32> to vector<32x256xf32>
      %21 = arith.mulf %13, %20 : vector<32x256xf32>
      %22 = arith.addf %19, %21 : vector<32x256xf32>
      %c0_15 = arith.constant 0 : index
      %c0_16 = arith.constant 0 : index
      %23 = vector.load %arg5[%c0_15, %c0_16] : memref<32x256xf32, #tpu.memory_space<vmem>>, vector<32x256xf32>
      tpu.vector_store %arg5[%c0_15, %c0_16], %22 {strides = array<i32>} : memref<32x256xf32, #tpu.memory_space<vmem>>, vector<32x256xf32>,
    } else {
    }
    return
  }
  func.func @transform_0(%arg0: i32, %arg1: i32) -> (i32, i32) {
    %c0_i32 = arith.constant 0 : i32
    %c0_i32_0 = arith.constant 0 : i32
    return %c0_i32, %arg1 : i32, i32
  }
  func.func @transform_1(%arg0: i32, %arg1: i32) -> (i32, i32) {
    %c0_i32 = arith.constant 0 : i32
    return %arg1, %arg0 : i32, i32
  }
  func.func @transform_2(%arg0: i32, %arg1: i32) -> (i32, i32) {
    %c0_i32 = arith.constant 0 : i32
    %c0_i32_0 = arith.constant 0 : i32
    return %c0_i32, %arg0 : i32, i32
  }
  func.func @transform_3(%arg0: i32, %arg1: i32) -> (i32, i32) {
    %c0_i32 = arith.constant 0 : i32
    %c0_i32_0 = arith.constant 0 : i32
    return %c0_i32, %arg0 : i32, i32
  }
}

</mosaic_0001>

<llo_original>
// kernel: tpu_custom_call.1
$region0: #{tpu_custom_call.1}
  #allocation0 [shape = 'u32[]', space=smem, size = 0x4, offset = 0x4, fixed_abs, tag = 'smem constant byte address 0x4 - core index']
  #allocation1 [shape = 'u32[144,128]{1,0:T(1,128)}', space=vmem, size = 0x12000, scoped, tag = 'internal scratch']
  #allocation2 [shape = 'f32[48,256]{1,0:T(8,128)}', space=vmem, size = 0xc000, scoped, tag = 'scratch operand']
  %s0 = inlined_call_operand.hbm [shape: bf16[48,512], index: 0, kind: input, shape index: {}]
  %s1 = inlined_call_operand.hbm [shape: bf16[512,512], index: 1, kind: input, shape index: {}]
  %s2 = inlined_call_operand.hbm [shape: f32[32,512], index: 2, kind: input, shape index: {}]
  %s3 = inlined_call_operand.hbm [shape: f32[32,512], index: 3, kind: output, shape index: {}]
  %s4 = sld [smem:[#allocation0]]
  $region65: #{tpu_custom_call.1} parent=0
    _
  %s6 = ssub.s32 1, %s4
  %s7 = scalar_select 0, %s6, %s4
  $region1: #{tpu_custom_call.1} parent=0
    #allocation3 [shape = 'u8[49152]{0}', space=vmem, size = 0xc000, scoped, tag = 'input window, operand 0']
    #allocation4 [shape = 's32[2]{0}', space=sflag, size = 0x8, scoped, tag = 'scoped memory for tpu_custom_call.1']
    #allocation5 [shape = 's32[2]{0}', space=sflag, size = 0x8, scoped, tag = 'scoped memory for tpu_custom_call.1']
    #allocation6 [shape = 'u8[262144]{0}', space=vmem, size = 0x40000, scoped, tag = 'input window, operand 1']
    #allocation7 [shape = 's32[2]{0}', space=sflag, size = 0x8, scoped, tag = 'scoped memory for tpu_custom_call.1']
    #allocation8 [shape = 'u8[65536]{0}', space=vmem, size = 0x10000, scoped, tag = 'input window, operand 2']
    #allocation9 [shape = 'u8[65536]{0}', space=vmem, size = 0x10000, scoped, tag = 'output window, operand 0']
    %8 = vsyncpa [#allocation4], 0
    %s9 = scalar_lea.sflag [#allocation4], 1
    %10 = vsyncpa %s9, 0
    %11 = vsyncpa [#allocation7], 0
    %s12 = scalar_lea.sflag [#allocation7], 1
    %13 = vsyncpa %s12, 0
    %14 = vsyncpa [#allocation5], 0
    %s15 = scalar_lea.sflag [#allocation5], 1
    %16 = vsyncpa %s15, 0
    loop: start=0, step=1, limit=6
    $region2: #{tpu_custom_call.1} parent=1 // loop_pre_header
      _
    $region3: #{tpu_custom_call.1} parent=1 // loop_header
      %s18 = sphi 0, %s22
      %p19 = scmp.ge.s32.totalorder %s18, 6
      %s25 = sphi 0, %s37
      %s26 = sphi 0, %s33
      %s27 = sphi 0, %s25
      %s28 = sphi 0, %s26
      %s29 = sphi 0, %s27
      %s30 = sphi 0, %s28
      %s40 = sphi 0, %s42
      %s43 = sphi 0, %s40
      %s44 = sphi 0, %s43
      %s60 = sphi 0, %s44
      %s68 = sphi 0, %s70
      %s71 = sphi 0, %s68
      %s72 = sphi 0, %s71
      %s88 = sphi 0, %s72
      %s94 = sphi 0, %s96
      %s97 = sphi 0, %s94
      %s98 = sphi 0, %s97
      %s114 = sphi 0, %s98
      %s120 = sphi 0, %s122
      %s123 = sphi 0, %s120
      %s124 = sphi 0, %s123
      %s140 = sphi 0, %s124
    $region4: #{tpu_custom_call.1} parent=1 // loop_header_branch
      %21 = sbr.rel (%p19) target = $region8
    $region5: #{tpu_custom_call.1} parent=1 // loop_body
      %s23 = ssub.s32 %s18, 1
      %s24 = ssub.s32 %s18, 2
      %s31 = sadd.s32 1, %s26
      %p32 = scmp.ge.s32.totalorder %s31, 2
      %s33 = scalar_select %p32, 0, %s31
      %s34 = sadd.s32 1, %s25
      %s35 = scalar_select %p32, %s34, %s25
      %p36 = scmp.ge.s32.totalorder %s35, 2
      %s37 = scalar_select %p36, 0, %s35
      %s38 = ssub.s32 %s26, %s33
      %p39 = scmp.eq.s32.totalorder %s38, 0
      %s41 = sadd.s32 %s40, 1
      %s42 = scalar_select %p39, %s40, %s41
      %p45 = pneg %p39
      %p46 = scmp.eq.s32.totalorder %s18, 3
      %p47 = por %p45, %p46
      %p48 = scmp.ne.s32.totalorder %s40, %s43
      %p49 = scmp.eq.s32.totalorder %s18, 0
      %p50 = por %p48, %p49
      %p51 = scmp.ne.s32.totalorder %s40, %s43
      %p52 = scmp.eq.s32.totalorder %s23, 3
      %p53 = por %p51, %p52
      %p54 = scmp.ne.s32.totalorder %s43, %s44
      %p55 = scmp.eq.s32.totalorder %s23, 0
      %p56 = por %p54, %p55
      %p57 = scmp.ne.s32.totalorder %s43, %s44
      %p58 = scmp.eq.s32.totalorder %s24, 3
      %p59 = por %p57, %p58
      %p61 = scmp.ne.s32.totalorder %s44, %s60
      %p62 = scmp.eq.s32.totalorder %s24, 0
      %p63 = por %p61, %p62
      %s64 = ssub.s32 %s26, %s33
      %s65 = ssub.s32 %s25, %s37
      %s66 = sor.u32 %s64, %s65
      %p67 = scmp.eq.s32.totalorder %s66, 0
      %s69 = sadd.s32 %s68, 1
      %s70 = scalar_select %p67, %s68, %s69
      %p73 = pneg %p67
      %p74 = scmp.eq.s32.totalorder %s18, 3
      %p75 = por %p73, %p74
      %p76 = scmp.ne.s32.totalorder %s68, %s71
      %p77 = scmp.eq.s32.totalorder %s18, 0
      %p78 = por %p76, %p77
      %p79 = scmp.ne.s32.totalorder %s68, %s71
      %p80 = scmp.eq.s32.totalorder %s23, 3
      %p81 = por %p79, %p80
      %p82 = scmp.ne.s32.totalorder %s71, %s72
      %p83 = scmp.eq.s32.totalorder %s23, 0
      %p84 = por %p82, %p83
      %p85 = scmp.ne.s32.totalorder %s71, %s72
      %p86 = scmp.eq.s32.totalorder %s24, 3
      %p87 = por %p85, %p86
      %p89 = scmp.ne.s32.totalorder %s72, %s88
      %p90 = scmp.eq.s32.totalorder %s24, 0
      %p91 = por %p89, %p90
      %s92 = ssub.s32 %s25, %s37
      %p93 = scmp.eq.s32.totalorder %s92, 0
      %s95 = sadd.s32 %s94, 1
      %s96 = scalar_select %p93, %s94, %s95
      %p99 = pneg %p93
      %p100 = scmp.eq.s32.totalorder %s18, 3
      %p101 = por %p99, %p100
      %p102 = scmp.ne.s32.totalorder %s94, %s97
      %p103 = scmp.eq.s32.totalorder %s18, 0
      %p104 = por %p102, %p103
      %p105 = scmp.ne.s32.totalorder %s94, %s97
      %p106 = scmp.eq.s32.totalorder %s23, 3
      %p107 = por %p105, %p106
      %p108 = scmp.ne.s32.totalorder %s97, %s98
      %p109 = scmp.eq.s32.totalorder %s23, 0
      %p110 = por %p108, %p109
      %p111 = scmp.ne.s32.totalorder %s97, %s98
      %p112 = scmp.eq.s32.totalorder %s24, 3
      %p113 = por %p111, %p112
      %p115 = scmp.ne.s32.totalorder %s98, %s114
      %p116 = scmp.eq.s32.totalorder %s24, 0
      %p117 = por %p115, %p116
      %s118 = ssub.s32 %s25, %s37
      %p119 = scmp.eq.s32.totalorder %s118, 0
      %s121 = sadd.s32 %s120, 1
      %s122 = scalar_select %p119, %s120, %s121
      %p125 = pneg %p119
      %p126 = scmp.eq.s32.totalorder %s18, 3
      %p127 = por %p125, %p126
      %p128 = scmp.ne.s32.totalorder %s120, %s123
      %p129 = scmp.eq.s32.totalorder %s18, 0
      %p130 = por %p128, %p129
      %p131 = scmp.ne.s32.totalorder %s120, %s123
      %p132 = scmp.eq.s32.totalorder %s23, 3
      %p133 = por %p131, %p132
      %p134 = scmp.ne.s32.totalorder %s123, %s124
      %p135 = scmp.eq.s32.totalorder %s23, 0
      %p136 = por %p134, %p135
      %p137 = scmp.ne.s32.totalorder %s123, %s124
      %p138 = scmp.eq.s32.totalorder %s24, 3
      %p139 = por %p137, %p138
      %p141 = scmp.ne.s32.totalorder %s124, %s140
      %p142 = scmp.eq.s32.totalorder %s24, 0
      %p143 = por %p141, %p142
      %p144 = scmp.le.s32.totalorder 1, %s18
      %p145 = scmp.lt.s32.totalorder %s18, 5
      %p146 = pnand %p144, %p145
      %p147 = pneg %p146
      // Predicated region
      $region9: #{tpu_custom_call.1} parent=5 // pred_check
        _
      $region10: #{tpu_custom_call.1} parent=5 // pred_check_branch
        %149 = sbr.rel (%p146) target = $region12
      $region11: #{tpu_custom_call.1} parent=5 // pred_region
        %s150 = ssub.s32 %s18, 1
      $region12: #{tpu_custom_call.1} parent=5 // pred_fallthru
        _
      %p151 = scmp.lt.s32.totalorder %s18, 4
      // Predicated region
      $region13: #{tpu_custom_call.1} parent=5 // pred_check
        %p152 = pneg %p151
      $region14: #{tpu_custom_call.1} parent=5 // pred_check_branch
        %154 = sbr.rel (%p152) target = $region16
      $region15: #{tpu_custom_call.1} parent=5 // pred_region
        // Predicated region
        $region17: #{tpu_custom_call.1} parent=15 // pred_check
          %p155 = pneg %p50
        $region18: #{tpu_custom_call.1} parent=15 // pred_check_branch
          %157 = sbr.rel (%p155) target = $region20
        $region19: #{tpu_custom_call.1} parent=15 // pred_region
          %s158 = sand.u32 %s40, 1
          %s159 = scalar_lea.sflag [#allocation4], %s158
          %s160 = sand.u32 %s40, 1
          %s161 = smul.addr %s160, 48
          %s162 = scalar_lea.vmem [#allocation3], %s161
          %s163 = smul.u32 2, %s26
          %s165 = ssub.s32 768, 768
          %166 = vsyncadd %s159, %s165
          %s167 = smul.addr %s163, 64
          %s168 = scalar_lea.hbm %s0, %s167
          %s169 = sshll.u32 %s162, 4
          %s170 = int_to_ptr.vmem [resolvable:$true] %s169
          %175 = dma.hbm_to_vmem [thread:$0]  %s168, 768, %s170, %s159, 256, 128, 8
        $region20: #{tpu_custom_call.1} parent=15 // pred_fallthru
          _
        // Predicated region
        $region21: #{tpu_custom_call.1} parent=15 // pred_check
          %p176 = pneg %p78
        $region22: #{tpu_custom_call.1} parent=15 // pred_check_branch
          %178 = sbr.rel (%p176) target = $region24
        $region23: #{tpu_custom_call.1} parent=15 // pred_region
          %s179 = sand.u32 %s18, 1
          %s180 = scalar_lea.sflag [#allocation7], %s179
          %s181 = sand.u32 %s68, 1
          %s182 = smul.addr %s181, 256
          %s183 = scalar_lea.vmem [#allocation6], %s182
          %s184 = smul.u32 32, %s26
          %s185 = smul.u32 2, %s25
          %s187 = ssub.s32 4096, 4096
          %188 = vsyncadd %s180, %s187
          %s189 = smul.addr %s184, 4
          %s190 = sadd.s32 %s185, %s189
          %s191 = smul.addr %s190, 64
          %s192 = scalar_lea.hbm %s1, %s191
          %s193 = sshll.u32 %s183, 4
          %s194 = int_to_ptr.vmem [resolvable:$true] %s193
          %199 = dma.hbm_to_vmem [thread:$0]  %s192, 4096, %s194, %s180, 256, 128, 8
        $region24: #{tpu_custom_call.1} parent=15 // pred_fallthru
          _
        // Predicated region
        $region25: #{tpu_custom_call.1} parent=15 // pred_check
          %p200 = pneg %p104
        $region26: #{tpu_custom_call.1} parent=15 // pred_check_branch
          %202 = sbr.rel (%p200) target = $region28
        $region27: #{tpu_custom_call.1} parent=15 // pred_region
          %s203 = sand.u32 %s18, 1
          %s204 = scalar_lea.sflag [#allocation7], %s203
          %s205 = sand.u32 %s94, 1
          %s206 = smul.addr %s205, 64
          %s207 = scalar_lea.vmem [#allocation8], %s206
          %s208 = smul.u32 2, %s25
          %s210 = ssub.s32 1024, 1024
          %211 = vsyncadd %s204, %s210
          %s212 = smul.addr %s208, 128
          %s213 = scalar_lea.hbm %s2, %s212
          %s214 = sshll.u32 %s207, 4
          %s215 = int_to_ptr.vmem [resolvable:$true] %s214
          %220 = dma.hbm_to_vmem [thread:$0]  %s213, 1024, %s215, %s204, 512, 256, 16
        $region28: #{tpu_custom_call.1} parent=15 // pred_fallthru
          _
      $region16: #{tpu_custom_call.1} parent=5 // pred_fallthru
        _
      %p221 = scmp.le.s32.totalorder 1, %s18
      %p222 = scmp.lt.s32.totalorder %s18, 5
      %p223 = pnand %p221, %p222
      %p224 = pneg %p223
      // Predicated region
      $region29: #{tpu_custom_call.1} parent=5 // pred_check
        _
      $region30: #{tpu_custom_call.1} parent=5 // pred_check_branch
        %226 = sbr.rel (%p223) target = $region32
      $region31: #{tpu_custom_call.1} parent=5 // pred_region
        %s227 = ssub.s32 %s18, 1
        %s228 = sand.u32 %s43, 1
        %s229 = scalar_lea.sflag [#allocation4], %s228
        %s230 = sand.u32 %s43, 1
        %s231 = smul.addr %s230, 48
        %s232 = scalar_lea.vmem [#allocation3], %s231
        // Predicated region
        $region33: #{tpu_custom_call.1} parent=31 // pred_check
          %p233 = pneg %p56
        $region34: #{tpu_custom_call.1} parent=31 // pred_check_branch
          %235 = sbr.rel (%p233) target = $region36
        $region35: #{tpu_custom_call.1} parent=31 // pred_region
          %236 = dma.done %s229, 768
        $region36: #{tpu_custom_call.1} parent=31 // pred_fallthru
          _
        %s237 = sand.u32 %s23, 1
        %s238 = scalar_lea.sflag [#allocation7], %s237
        %s239 = sand.u32 %s71, 1
        %s240 = smul.addr %s239, 256
        %s241 = scalar_lea.vmem [#allocation6], %s240
        // Predicated region
        $region37: #{tpu_custom_call.1} parent=31 // pred_check
          %p242 = pneg %p84
        $region38: #{tpu_custom_call.1} parent=31 // pred_check_branch
          %244 = sbr.rel (%p242) target = $region40
        $region39: #{tpu_custom_call.1} parent=31 // pred_region
          %245 = dma.done %s238, 4096
        $region40: #{tpu_custom_call.1} parent=31 // pred_fallthru
          _
        %s246 = sand.u32 %s23, 1
        %s247 = scalar_lea.sflag [#allocation7], %s246
        %s248 = sand.u32 %s97, 1
        %s249 = smul.addr %s248, 64
        %s250 = scalar_lea.vmem [#allocation8], %s249
        // Predicated region
        $region41: #{tpu_custom_call.1} parent=31 // pred_check
          %p251 = pneg %p110
        $region42: #{tpu_custom_call.1} parent=31 // pred_check_branch
          %253 = sbr.rel (%p251) target = $region44
        $region43: #{tpu_custom_call.1} parent=31 // pred_region
          %254 = dma.done %s247, 1024
        $region44: #{tpu_custom_call.1} parent=31 // pred_fallthru
          _
        %s255 = sand.u32 %s43, 1
        %s256 = scalar_lea.sflag [#allocation4], %s255
        %s257 = sand.u32 %s43, 1
        %s258 = smul.addr %s257, 48
        %s259 = scalar_lea.vmem [#allocation3], %s258
        %p260 = pneg %p56
        %p261 = pneg %p53
        %s262 = sand.u32 %s23, 1
        %s263 = scalar_lea.sflag [#allocation7], %s262
        %s264 = sand.u32 %s71, 1
        %s265 = smul.addr %s264, 256
        %s266 = scalar_lea.vmem [#allocation6], %s265
        %p267 = pneg %p84
        %p268 = pneg %p81
        %s269 = sand.u32 %s23, 1
        %s270 = scalar_lea.sflag [#allocation7], %s269
        %s271 = sand.u32 %s97, 1
        %s272 = smul.addr %s271, 64
        %s273 = scalar_lea.vmem [#allocation8], %s272
        %p274 = pneg %p110
        %p275 = pneg %p107
        %p276 = pneg %p136
        %p277 = pneg %p133
        %s278 = sand.u32 %s123, 1
        %s279 = scalar_lea.sflag [#allocation5], %s278
        %s280 = sand.u32 %s123, 1
        %s281 = smul.addr %s280, 64
        %s282 = scalar_lea.vmem [#allocation9], %s281
        %s283 = smul.u32 2, %s28
        %s284 = smul.u32 32, %s28
        %s285 = smul.u32 2, %s27
        %s286 = smul.u32 2, %s27
        %s287 = smul.u32 2, %s27
        %p288 = scmp.eq.s32.totalorder %s28, 0
        // Predicated region
        $region45: #{tpu_custom_call.1} parent=31 // pred_check
          %p289 = pneg %p288
        $region46: #{tpu_custom_call.1} parent=31 // pred_check_branch
          %291 = sbr.rel (%p289) target = $region48
        $region47: #{tpu_custom_call.1} parent=31 // pred_region
          %292 = vst [vmem:[#allocation2] sm:$0xff] 0.0
          %293 = vst [vmem:[#allocation2 + $0x8] sm:$0xff] 0.0
          %294 = vst [vmem:[#allocation2 + $0x10] sm:$0xff] 0.0
          %295 = vst [vmem:[#allocation2 + $0x18] sm:$0xff] 0.0
          %296 = vst [vmem:[#allocation2 + $0x20] sm:$0xff] 0.0
          %297 = vst [vmem:[#allocation2 + $0x28] sm:$0xff] 0.0
          %298 = vst [vmem:[#allocation2 + $0x30] sm:$0xff] 0.0
          %299 = vst [vmem:[#allocation2 + $0x38] sm:$0xff] 0.0
          %300 = vst [vmem:[#allocation2 + $0x40] sm:$0xff] 0.0
          %301 = vst [vmem:[#allocation2 + $0x48] sm:$0xff] 0.0
          %302 = vst [vmem:[#allocation2 + $0x50] sm:$0xff] 0.0
          %303 = vst [vmem:[#allocation2 + $0x58] sm:$0xff] 0.0
        $region48: #{tpu_custom_call.1} parent=31 // pred_fallthru
          _
        %v304 = vld [vmem:[#allocation2] sm:$0xff]
        %v305 = vld [vmem:[#allocation2 + $0x8] sm:$0xff]
        %v306 = vld [vmem:[#allocation2 + $0x10] sm:$0xff]
        %v307 = vld [vmem:[#allocation2 + $0x18] sm:$0xff]
        %v308 = vld [vmem:[#allocation2 + $0x20] sm:$0xff]
        %v309 = vld [vmem:[#allocation2 + $0x28] sm:$0xff]
        %v310 = vld [vmem:[#allocation2 + $0x30] sm:$0xff]
        %v311 = vld [vmem:[#allocation2 + $0x38] sm:$0xff]
        %v312 = vld [vmem:[#allocation2 + $0x40] sm:$0xff]
        %v313 = vld [vmem:[#allocation2 + $0x48] sm:$0xff]
        %v314 = vld [vmem:[#allocation2 + $0x50] sm:$0xff]
        %v315 = vld [vmem:[#allocation2 + $0x58] sm:$0xff]
        %v316 = vld [vmem:[%s232] sm:$0xff]
        %v317 = vld [vmem:[%s232 + $0x8] sm:$0xff]
        %v318 = vld [vmem:[%s232 + $0x10] sm:$0xff]
        %v319 = vld [vmem:[%s232 + $0x18] sm:$0xff]
        %v320 = vld [vmem:[%s232 + $0x20] sm:$0xff]
        %v321 = vld [vmem:[%s232 + $0x28] sm:$0xff]
        %v322 = vld [vmem:[%s241] sm:$0xff]
        %v323 = vld [vmem:[%s241 + $0x8] sm:$0xff]
        %v324 = vld [vmem:[%s241 + $0x10] sm:$0xff]
        %v325 = vld [vmem:[%s241 + $0x18] sm:$0xff]
        %v326 = vld [vmem:[%s241 + $0x20] sm:$0xff]
        %v327 = vld [vmem:[%s241 + $0x28] sm:$0xff]
        %v328 = vld [vmem:[%s241 + $0x30] sm:$0xff]
        %v329 = vld [vmem:[%s241 + $0x38] sm:$0xff]
        %v330 = vld [vmem:[%s241 + $0x40] sm:$0xff]
        %v331 = vld [vmem:[%s241 + $0x48] sm:$0xff]
        %v332 = vld [vmem:[%s241 + $0x50] sm:$0xff]
        %v333 = vld [vmem:[%s241 + $0x58] sm:$0xff]
        %v334 = vld [vmem:[%s241 + $0x60] sm:$0xff]
        %v335 = vld [vmem:[%s241 + $0x68] sm:$0xff]
        %v336 = vld [vmem:[%s241 + $0x70] sm:$0xff]
        %v337 = vld [vmem:[%s241 + $0x78] sm:$0xff]
        %v338 = vld [vmem:[%s241 + $0x80] sm:$0xff]
        %v339 = vld [vmem:[%s241 + $0x88] sm:$0xff]
        %v340 = vld [vmem:[%s241 + $0x90] sm:$0xff]
        %v341 = vld [vmem:[%s241 + $0x98] sm:$0xff]
        %v342 = vld [vmem:[%s241 + $0xa0] sm:$0xff]
        %v343 = vld [vmem:[%s241 + $0xa8] sm:$0xff]
        %v344 = vld [vmem:[%s241 + $0xb0] sm:$0xff]
        %v345 = vld [vmem:[%s241 + $0xb8] sm:$0xff]
        %v346 = vld [vmem:[%s241 + $0xc0] sm:$0xff]
        %v347 = vld [vmem:[%s241 + $0xc8] sm:$0xff]
        %v348 = vld [vmem:[%s241 + $0xd0] sm:$0xff]
        %v349 = vld [vmem:[%s241 + $0xd8] sm:$0xff]
        %v350 = vld [vmem:[%s241 + $0xe0] sm:$0xff]
        %v351 = vld [vmem:[%s241 + $0xe8] sm:$0xff]
        %v352 = vld [vmem:[%s241 + $0xf0] sm:$0xff]
        %v353 = vld [vmem:[%s241 + $0xf8] sm:$0xff]
        %v360 = vunpack.c.l.b16 %v316
        %v361 = vunpack.c.h.b16 %v316
        %v362 = vunpack.c.l.b16 %v317
        %v363 = vunpack.c.h.b16 %v317
        %v364 = vunpack.c.l.b16 %v318
        %v365 = vunpack.c.h.b16 %v318
        %v366 = vunpack.c.l.b16 %v319
        %v367 = vunpack.c.h.b16 %v319
        %v368 = vunpack.c.l.b16 %v320
        %v369 = vunpack.c.h.b16 %v320
        %v370 = vunpack.c.l.b16 %v321
        %v371 = vunpack.c.h.b16 %v321
        %v372 = vpack.c.b16 %v362, %v360
        %v373 = vpack.c.b16 %v363, %v361
        %v374 = vpack.c.b16 %v366, %v364
        %v375 = vpack.c.b16 %v367, %v365
        %v376 = vpack.c.b16 %v370, %v368
        %v377 = vpack.c.b16 %v371, %v369
        %v416 = vunpack.c.l.b16 %v322
        %v417 = vunpack.c.h.b16 %v322
        %v418 = vunpack.c.l.b16 %v323
        %v419 = vunpack.c.h.b16 %v323
        %v420 = vunpack.c.l.b16 %v324
        %v421 = vunpack.c.h.b16 %v324
        %v422 = vunpack.c.l.b16 %v325
        %v423 = vunpack.c.h.b16 %v325
        %v424 = vunpack.c.l.b16 %v326
        %v425 = vunpack.c.h.b16 %v326
        %v426 = vunpack.c.l.b16 %v327
        %v427 = vunpack.c.h.b16 %v327
        %v428 = vunpack.c.l.b16 %v328
        %v429 = vunpack.c.h.b16 %v328
        %v430 = vunpack.c.l.b16 %v329
        %v431 = vunpack.c.h.b16 %v329
        %v432 = vunpack.c.l.b16 %v330
        %v433 = vunpack.c.h.b16 %v330
        %v434 = vunpack.c.l.b16 %v331
        %v435 = vunpack.c.h.b16 %v331
        %v436 = vunpack.c.l.b16 %v332
        %v437 = vunpack.c.h.b16 %v332
        %v438 = vunpack.c.l.b16 %v333
        %v439 = vunpack.c.h.b16 %v333
        %v440 = vunpack.c.l.b16 %v334
        %v441 = vunpack.c.h.b16 %v334
        %v442 = vunpack.c.l.b16 %v335
        %v443 = vunpack.c.h.b16 %v335
        %v444 = vunpack.c.l.b16 %v336
        %v445 = vunpack.c.h.b16 %v336
        %v446 = vunpack.c.l.b16 %v337
        %v447 = vunpack.c.h.b16 %v337
        %v448 = vunpack.c.l.b16 %v338
        %v449 = vunpack.c.h.b16 %v338
        %v450 = vunpack.c.l.b16 %v339
        %v451 = vunpack.c.h.b16 %v339
        %v452 = vunpack.c.l.b16 %v340
        %v453 = vunpack.c.h.b16 %v340
        %v454 = vunpack.c.l.b16 %v341
        %v455 = vunpack.c.h.b16 %v341
        %v456 = vunpack.c.l.b16 %v342
        %v457 = vunpack.c.h.b16 %v342
        %v458 = vunpack.c.l.b16 %v343
        %v459 = vunpack.c.h.b16 %v343
        %v460 = vunpack.c.l.b16 %v344
        %v461 = vunpack.c.h.b16 %v344
        %v462 = vunpack.c.l.b16 %v345
        %v463 = vunpack.c.h.b16 %v345
        %v464 = vunpack.c.l.b16 %v346
        %v465 = vunpack.c.h.b16 %v346
        %v466 = vunpack.c.l.b16 %v347
        %v467 = vunpack.c.h.b16 %v347
        %v468 = vunpack.c.l.b16 %v348
        %v469 = vunpack.c.h.b16 %v348
        %v470 = vunpack.c.l.b16 %v349
        %v471 = vunpack.c.h.b16 %v349
        %v472 = vunpack.c.l.b16 %v350
        %v473 = vunpack.c.h.b16 %v350
        %v474 = vunpack.c.l.b16 %v351
        %v475 = vunpack.c.h.b16 %v351
        %v476 = vunpack.c.l.b16 %v352
        %v477 = vunpack.c.h.b16 %v352
        %v478 = vunpack.c.l.b16 %v353
        %v479 = vunpack.c.h.b16 %v353
        %v480 = vpack.c.b16 %v418, %v416
        %v481 = vpack.c.b16 %v419, %v417
        %v482 = vpack.c.b16 %v422, %v420
        %v483 = vpack.c.b16 %v423, %v421
        %v484 = vpack.c.b16 %v426, %v424
        %v485 = vpack.c.b16 %v427, %v425
        %v486 = vpack.c.b16 %v430, %v428
        %v487 = vpack.c.b16 %v431, %v429
        %v488 = vpack.c.b16 %v434, %v432
        %v489 = vpack.c.b16 %v435, %v433
        %v490 = vpack.c.b16 %v438, %v436
        %v491 = vpack.c.b16 %v439, %v437
        %v492 = vpack.c.b16 %v442, %v440
        %v493 = vpack.c.b16 %v443, %v441
        %v494 = vpack.c.b16 %v446, %v444
        %v495 = vpack.c.b16 %v447, %v445
        %v496 = vpack.c.b16 %v450, %v448
        %v497 = vpack.c.b16 %v451, %v449
        %v498 = vpack.c.b16 %v454, %v452
        %v499 = vpack.c.b16 %v455, %v453
        %v500 = vpack.c.b16 %v458, %v456
        %v501 = vpack.c.b16 %v459, %v457
        %v502 = vpack.c.b16 %v462, %v460
        %v503 = vpack.c.b16 %v463, %v461
        %v504 = vpack.c.b16 %v466, %v464
        %v505 = vpack.c.b16 %v467, %v465
        %v506 = vpack.c.b16 %v470, %v468
        %v507 = vpack.c.b16 %v471, %v469
        %v508 = vpack.c.b16 %v474, %v472
        %v509 = vpack.c.b16 %v475, %v473
        %v510 = vpack.c.b16 %v478, %v476
        %v511 = vpack.c.b16 %v479, %v477
        %544 = vmatprep.subr.bf16.mxu0 %v495
        %545 = vmatpush1.bf16.msra.mxu0 %v494
        %546 = vmatprep.subr.bf16.mxu0 %v493
        %547 = vmatpush1.bf16.msra.mxu0 %v492
        %548 = vmatprep.subr.bf16.mxu0 %v491
        %549 = vmatpush1.bf16.msra.mxu0 %v490
        %550 = vmatprep.subr.bf16.mxu0 %v489
        %551 = vmatpush1.bf16.msra.mxu0 %v488
        %552 = vmatprep.subr.bf16.mxu0 %v487
        %553 = vmatpush1.bf16.msra.mxu0 %v486
        %554 = vmatprep.subr.bf16.mxu0 %v485
        %555 = vmatpush1.bf16.msra.mxu0 %v484
        %556 = vmatprep.subr.bf16.mxu0 %v483
        %557 = vmatpush1.bf16.msra.mxu0 %v482
        %558 = vmatprep.subr.bf16.mxu0 %v481
        %559 = vmatpush1.bf16.msra.mxu0 %v480
        %560 = vmatprep.subr.bf16.mxu0 %v511
        %561 = vmatpush2.bf16.msra.mxu0 %v510
        %562 = vmatprep.subr.bf16.mxu0 %v509
        %563 = vmatpush2.bf16.msra.mxu0 %v508
        %564 = vmatprep.subr.bf16.mxu0 %v507
        %565 = vmatpush2.bf16.msra.mxu0 %v506
        %566 = vmatprep.subr.bf16.mxu0 %v505
        %567 = vmatpush2.bf16.msra.mxu0 %v504
        %568 = vmatprep.subr.bf16.mxu0 %v503
        %569 = vmatpush2.bf16.msra.mxu0 %v502
        %570 = vmatprep.subr.bf16.mxu0 %v501
        %571 = vmatpush2.bf16.msra.mxu0 %v500
        %572 = vmatprep.subr.bf16.mxu0 %v499
        %573 = vmatpush2.bf16.msra.mxu0 %v498
        %574 = vmatprep.subr.bf16.mxu0 %v497
        %575 = vmatpush2.bf16.msra.mxu0 %v496
        %576 = vmatprep.mubr.bf16.mxu0 %v373
        %577 = vmatmul.mubr.bf16.gmra.mxu0 %v372
        %v578 = vpop.f32.mrf.mxu0
        %v579 = vadd.f32 0.0, %v578
        %v580 = vpop.f32.mrf.mxu0
        %v581 = vadd.f32 0.0, %v580
        %v582 = vpop.f32.mrf.mxu0
        %v583 = vadd.f32 0.0, %v582
        %v584 = vpop.f32.mrf.mxu0
        %v585 = vadd.f32 0.0, %v584
        %586 = vmatprep.mubr.bf16.mxu0 %v375
        %587 = vmatmul.mubr.bf16.gmra.mxu0 %v374
        %v588 = vpop.f32.mrf.mxu0
        %v589 = vadd.f32 0.0, %v588
        %v590 = vpop.f32.mrf.mxu0
        %v591 = vadd.f32 0.0, %v590
        %v592 = vpop.f32.mrf.mxu0
        %v593 = vadd.f32 0.0, %v592
        %v594 = vpop.f32.mrf.mxu0
        %v595 = vadd.f32 0.0, %v594
        %596 = vmatprep.mubr.bf16.mxu0 %v377
        %597 = vmatmul.mubr.bf16.gmra.mxu0 %v376
        %v598 = vpop.f32.mrf.mxu0
        %v599 = vadd.f32 0.0, %v598
        %v600 = vpop.f32.mrf.mxu0
        %v601 = vadd.f32 0.0, %v600
        %v602 = vpop.f32.mrf.mxu0
        %v603 = vadd.f32 0.0, %v602
        %v604 = vpop.f32.mrf.mxu0
        %v605 = vadd.f32 0.0, %v604
        %606 = vdwg.mxu0
        %v607 = vadd.f32 %v304, %v579
        %v608 = vadd.f32 %v305, %v581
        %v609 = vadd.f32 %v306, %v583
        %v610 = vadd.f32 %v307, %v585
        %v611 = vadd.f32 %v308, %v589
        %v612 = vadd.f32 %v309, %v591
        %v613 = vadd.f32 %v310, %v593
        %v614 = vadd.f32 %v311, %v595
        %v615 = vadd.f32 %v312, %v599
        %v616 = vadd.f32 %v313, %v601
        %v617 = vadd.f32 %v314, %v603
        %v618 = vadd.f32 %v315, %v605
        %619 = vst [vmem:[#allocation2] sm:$0xff] %v607
        %620 = vst [vmem:[#allocation2 + $0x8] sm:$0xff] %v608
        %621 = vst [vmem:[#allocation2 + $0x10] sm:$0xff] %v609
        %622 = vst [vmem:[#allocation2 + $0x18] sm:$0xff] %v610
        %623 = vst [vmem:[#allocation2 + $0x20] sm:$0xff] %v611
        %624 = vst [vmem:[#allocation2 + $0x28] sm:$0xff] %v612
        %625 = vst [vmem:[#allocation2 + $0x30] sm:$0xff] %v613
        %626 = vst [vmem:[#allocation2 + $0x38] sm:$0xff] %v614
        %627 = vst [vmem:[#allocation2 + $0x40] sm:$0xff] %v615
        %628 = vst [vmem:[#allocation2 + $0x48] sm:$0xff] %v616
        %629 = vst [vmem:[#allocation2 + $0x50] sm:$0xff] %v617
        %630 = vst [vmem:[#allocation2 + $0x58] sm:$0xff] %v618
        %p631 = scmp.eq.s32.totalorder %s28, 1
        // Predicated region
        $region49: #{tpu_custom_call.1} parent=31 // pred_check
          %p632 = pneg %p631
        $region50: #{tpu_custom_call.1} parent=31 // pred_check_branch
          %634 = sbr.rel (%p632) target = $region52
        $region51: #{tpu_custom_call.1} parent=31 // pred_region
          %v635 = vld [vmem:[#allocation2] sm:$0xff]
          %v636 = vld [vmem:[#allocation2 + $0x8] sm:$0xff]
          %v637 = vld [vmem:[#allocation2 + $0x10] sm:$0xff]
          %v638 = vld [vmem:[#allocation2 + $0x18] sm:$0xff]
          %v639 = vld [vmem:[#allocation2 + $0x20] sm:$0xff]
          %v640 = vld [vmem:[#allocation2 + $0x28] sm:$0xff]
          %v641 = vld [vmem:[#allocation2 + $0x30] sm:$0xff]
          %v642 = vld [vmem:[#allocation2 + $0x38] sm:$0xff]
          %v643 = vld [vmem:[#allocation2 + $0x40] sm:$0xff]
          %v644 = vld [vmem:[#allocation2 + $0x48] sm:$0xff]
          %v645 = vmax.f32 %v643, 1.0
          %v646 = vmax.f32 %v644, 1.0
          %v647 = vrcp.pop %v645
          %v648 = vmul.f32 1.0, %v647
          %v649 = vrcp.pop %v646
          %v650 = vmul.f32 1.0, %v649
          %v651 = vld [vmem:[%s250] sm:$0xff]
          %v652 = vld [vmem:[%s250 + $0x8] sm:$0xff]
          %v653 = vld [vmem:[%s250 + $0x10] sm:$0xff]
          %v654 = vld [vmem:[%s250 + $0x18] sm:$0xff]
          %v655 = vld [vmem:[%s250 + $0x20] sm:$0xff]
          %v656 = vld [vmem:[%s250 + $0x28] sm:$0xff]
          %v657 = vld [vmem:[%s250 + $0x30] sm:$0xff]
          %v658 = vld [vmem:[%s250 + $0x38] sm:$0xff]
          %v659 = vlaneseq
          %v660 = vshrl.u32 %v659, 7
          %v661 = vsub.s32 0, %v660
          %v662 = vrot.slane %v648, %v661
          %v663 = vlaneseq
          %v664 = vshrl.u32 %v663, 7
          %v665 = vsub.s32 0, %v664
          %v666 = vrot.slane %v650, %v665
          %v667 = vmul.f32 %v635, %v662
          %v668 = vmul.f32 %v636, %v666
          %v669 = vmul.f32 %v637, %v662
          %v670 = vmul.f32 %v638, %v666
          %v671 = vmul.f32 %v639, %v662
          %v672 = vmul.f32 %v640, %v666
          %v673 = vmul.f32 %v641, %v662
          %v674 = vmul.f32 %v642, %v666
          %v675 = vadd.f32 %v651, %v667
          %v676 = vadd.f32 %v652, %v668
          %v677 = vadd.f32 %v653, %v669
          %v678 = vadd.f32 %v654, %v670
          %v679 = vadd.f32 %v655, %v671
          %v680 = vadd.f32 %v656, %v672
          %v681 = vadd.f32 %v657, %v673
          %v682 = vadd.f32 %v658, %v674
          %683 = vst [vmem:[%s282] sm:$0xff] %v675
          %684 = vst [vmem:[%s282 + $0x8] sm:$0xff] %v676
          %685 = vst [vmem:[%s282 + $0x10] sm:$0xff] %v677
          %686 = vst [vmem:[%s282 + $0x18] sm:$0xff] %v678
          %687 = vst [vmem:[%s282 + $0x20] sm:$0xff] %v679
          %688 = vst [vmem:[%s282 + $0x28] sm:$0xff] %v680
          %689 = vst [vmem:[%s282 + $0x30] sm:$0xff] %v681
          %690 = vst [vmem:[%s282 + $0x38] sm:$0xff] %v682
        $region52: #{tpu_custom_call.1} parent=31 // pred_fallthru
          _
        %s691 = sand.u32 %s123, 1
        %s692 = scalar_lea.sflag [#allocation5], %s691
        %s693 = sand.u32 %s123, 1
        %s694 = smul.addr %s693, 64
        %s695 = scalar_lea.vmem [#allocation9], %s694
        // Predicated region
        $region53: #{tpu_custom_call.1} parent=31 // pred_check
          %p696 = pneg %p133
        $region54: #{tpu_custom_call.1} parent=31 // pred_check_branch
          %698 = sbr.rel (%p696) target = $region56
        $region55: #{tpu_custom_call.1} parent=31 // pred_region
          %s699 = smul.u32 2, %s27
          %s701 = ssub.s32 1024, 1024
          %702 = vsyncadd %s692, %s701
          %s703 = smul.addr %s699, 128
          %s704 = scalar_lea.hbm %s3, %s703
          %s705 = sshll.u32 %s695, 4
          %s706 = int_to_ptr.vmem [resolvable:$true] %s705
          %711 = dma.vmem_to_hbm [thread:$0]  %s706, 1024, %s704, %s692, 256, 512, 16
        $region56: #{tpu_custom_call.1} parent=31 // pred_fallthru
          _
      $region32: #{tpu_custom_call.1} parent=5 // pred_fallthru
        _
      %p712 = scmp.le.s32.totalorder 2, %s18
      // Predicated region
      $region57: #{tpu_custom_call.1} parent=5 // pred_check
        %p713 = pneg %p712
      $region58: #{tpu_custom_call.1} parent=5 // pred_check_branch
        %715 = sbr.rel (%p713) target = $region60
      $region59: #{tpu_custom_call.1} parent=5 // pred_region
        %s716 = ssub.s32 %s18, 2
        // Predicated region
        $region61: #{tpu_custom_call.1} parent=59 // pred_check
          %p717 = pneg %p139
        $region62: #{tpu_custom_call.1} parent=59 // pred_check_branch
          %719 = sbr.rel (%p717) target = $region64
        $region63: #{tpu_custom_call.1} parent=59 // pred_region
          %s720 = sand.u32 %s124, 1
          %s721 = scalar_lea.sflag [#allocation5], %s720
          %s722 = sand.u32 %s124, 1
          %s723 = smul.addr %s722, 64
          %s724 = scalar_lea.vmem [#allocation9], %s723
          %725 = dma.done %s721, 1024
        $region64: #{tpu_custom_call.1} parent=59 // pred_fallthru
          _
      $region60: #{tpu_custom_call.1} parent=5 // pred_fallthru
        _
    $region6: #{tpu_custom_call.1} parent=1 // loop_footer
      %s22 = sadd.s32 1, %s18
    $region7: #{tpu_custom_call.1} parent=1 // loop_footer_branch
      %17 = sbr.rel target = $region3
    $region8: #{tpu_custom_call.1} parent=1 // loop_exit
      _
    %726 = vsyncpa [#allocation4], 1
    %s727 = scalar_lea.sflag [#allocation4], 1
    %728 = vsyncpa %s727, 1
    %729 = vsyncpa [#allocation7], 1
    %s730 = scalar_lea.sflag [#allocation7], 1
    %731 = vsyncpa %s730, 1
    %732 = vsyncpa [#allocation5], 1
    %s733 = scalar_lea.sflag [#allocation5], 1
    %734 = vsyncpa %s733, 1

</llo_original>
